<compile_context>
chip_gen: v5e
topology: v5e:2x2
jax: 0.10.0
libtpu: 0.0.40
codegen_flags: <defaults>
</compile_context>

<pallas_src>
import jax
import jax.numpy as jnp
from jax.experimental import pallas as pl
from jax.experimental.pallas import tpu as pltpu


def _attention_kernel(hidp_ref, enc_ref, maskT_ref, we_ref, v_ref, out_ref):
    # hidp_ref  : [TB, D]        precomputed hidden[-1] @ Wh + b for this block
    # enc_ref   : [S, TB, E2]    encoder outputs, native [S, B, 2E] layout block
    # maskT_ref : [S, TB] int32  0 => masked out
    # we_ref    : [E2, D]
    # v_ref     : [1, D]
    # out_ref   : [S, TB]        softmax attention weights (transposed)
    S, TB, E2 = enc_ref.shape

    # One big MXU matmul over all S*TB rows of this block (leading-dim flatten
    # and split are free: the lane dim stays last).
    enc2d = enc_ref[...].reshape(S * TB, E2)
    enc_part = jnp.dot(enc2d, we_ref[...],
                       preferred_element_type=jnp.float32)            # [S*TB, D]
    enc_part = enc_part.reshape(S, TB, enc_part.shape[-1])             # [S, TB, D]

    # energy = tanh(hid@Wh + enc@We + b); hid part precomputed in the wrapper,
    # broadcast along the leading (S) dim -> pure tile reuse, no relayout.
    energy = jnp.tanh(enc_part + hidp_ref[...].astype(jnp.float32)[None, :, :])

    # scores = energy @ v as a VPU multiply + lane reduce (avoids N=1 matmul).
    v_b = v_ref[...].astype(jnp.float32)[None, :, :]                   # [1, 1, D]
    scores = jnp.sum(energy * v_b, axis=-1)                            # [S, TB]

    # masked_fill(mask == 0, -1e10)
    scores = jnp.where(maskT_ref[...] == 0, jnp.float32(-1e10), scores)

    # softmax over src_len (sublane axis of the lane-dense [S, TB] tile).
    m = jnp.max(scores, axis=0, keepdims=True)                         # [1, TB]
    e = jnp.exp(scores - m)                                            # [S, TB]
    denom = jnp.sum(e, axis=0, keepdims=True)                          # [1, TB]
    out_ref[...] = e * pl.reciprocal(denom, approx=False)


def _choose_tb(B, S, E2, itemsize, target_bytes=1 << 20):
    """Batch-block size: ~target_bytes of encoder data per grid step.

    Must be a multiple of 128 that divides B (keeps the [S, TB] mask/out blocks
    lane-dense and (8,128)-legal) or else the full batch.  Capped at B//2 so
    large batches keep >=2 grid steps (v7x dual-TensorCore sharding)."""
    per_b = S * E2 * itemsize
    want = max(1, target_bytes // per_b)
    want = min(want, max(1, B // 2))
    tb = (want // 128) * 128
    while tb >= 128 and B % tb:
        tb -= 128
    if tb >= 128:
        return tb
    return B


def attention_forward(hidden, encoder_outputs, mask, params, *,
                      use_bf16=False, target_block_bytes=1 << 20):
    """Pallas implementation of Attention.forward.

    hidden          : [n_layer, B, D_dec]
    encoder_outputs : [S, B, 2*E_enc]   (consumed in this native layout)
    mask            : [B, S]            (0 => masked out)
    returns         : [B, S]            softmax attention weights
    """
    wh, we, b, v = params["wh"], params["we"], params["b"], params["v"]
    n_layer, B, D = hidden.shape
    S, _, E2 = encoder_outputs.shape

    # Hoist the hidden projection out of the kernel: one [B,D]x[D,D] XLA matmul.
    hid_part = (hidden[-1] @ wh + b).astype(jnp.float32)               # [B, D]

    # Matmul-operand dtype.  bf16 halves the dominant HBM stream and uses the
    # bf16 MXU; accumulation and all softmax math stay f32.  (Ideally the
    # encoder already emits bf16 so the cast below is a no-op.)
    mm_dtype = jnp.bfloat16 if use_bf16 else encoder_outputs.dtype
    enc = encoder_outputs if encoder_outputs.dtype == mm_dtype \
        else encoder_outputs.astype(mm_dtype)
    we_m = we if we.dtype == mm_dtype else we.astype(mm_dtype)          # [E2, D]
    v_row = v.reshape(1, D).astype(jnp.float32)                         # [1, D]
    maskT = mask.astype(jnp.int32).T                                    # [S, B] (tiny)

    itemsize = jnp.dtype(enc.dtype).itemsize
    TB = _choose_tb(B, S, E2, itemsize, target_block_bytes)
    grid = (B // TB,)

    # Explicit VMEM budget: double-buffered blocks + resident weights + slack,
    # clamped to [16 MiB, 48 MiB] so it is safe on v5e/v6e/v7x alike.
    blk_bytes = (S * TB * E2 * itemsize      # enc block
                 + TB * D * 4                # hid block
                 + 2 * S * TB * 4)           # mask + out blocks
    fixed = E2 * D * jnp.dtype(we_m.dtype).itemsize + D * 4
    vmem_limit = int(min(max(4 * blk_bytes + 2 * fixed + (1 << 20), 16 << 20),
                         48 << 20))

    out_sb = pl.pallas_call(
        _attention_kernel,
        out_shape=jax.ShapeDtypeStruct((S, B), jnp.float32),
        grid_spec=pltpu.PrefetchScalarGridSpec(
            num_scalar_prefetch=0,
            grid=grid,
            in_specs=[
                pl.BlockSpec((TB, D), lambda bi: (bi, 0)),            # hid_part
                pl.BlockSpec((S, TB, E2), lambda bi: (0, bi, 0)),     # enc (native)
                pl.BlockSpec((S, TB), lambda bi: (0, bi)),            # mask.T
                pl.BlockSpec((E2, D), lambda bi: (0, 0)),             # We
                pl.BlockSpec((1, D), lambda bi: (0, 0)),              # v
            ],
            out_specs=pl.BlockSpec((S, TB), lambda bi: (0, bi)),
        ),
        compiler_params=pltpu.CompilerParams(
            dimension_semantics=("parallel",),
            vmem_limit_bytes=vmem_limit),
    )(hid_part, enc, maskT, we_m, v_row)

    # Tiny [S, B] -> [B, S] transpose in XLA (output is ~E2/2 x smaller than
    # the enc stream, so this costs a few percent of the kernel's HBM traffic).
    return out_sb.T


def attention_reference(hidden, encoder_outputs, mask, params):
    """Pure-JAX reference mirroring the PyTorch forward exactly."""
    wh, we, b, v = params["wh"], params["we"], params["b"], params["v"]
    hid = hidden[-1]                                                   # [B, D]
    S = encoder_outputs.shape[0]
    hid_rep = jnp.repeat(hid[:, None, :], S, axis=1)                   # [B, S, D]
    enc = jnp.transpose(encoder_outputs, (1, 0, 2))                    # [B, S, 2E]
    cat = jnp.concatenate([hid_rep, enc], axis=2)                      # [B, S, D+2E]
    w_full = jnp.concatenate([wh, we], axis=0)                         # [D+2E, D]
    energy = jnp.tanh(cat @ w_full + b)                                # [B, S, D]
    attn = (energy @ v)[..., 0]                                        # [B, S]
    attn = jnp.where(mask == 0, -1e10, attn)
    return jax.nn.softmax(attn, axis=1)


if __name__ == "__main__":
    # Small, module-consistent shapes.
    n_layer, B, S = 2, 2, 8
    enc_hid, dec_hid = 32, 32
    E2 = enc_hid * 2
    in_dim = E2 + dec_hid

    key = jax.random.PRNGKey(0)
    k1, k2, k3, k4, k5, k6 = jax.random.split(key, 6)

    # Deterministic parameter init (Linear weight [out,in] -> stored transposed [in,out]).
    w_attn = jax.random.normal(k1, (in_dim, dec_hid), jnp.float32) * 0.1
    b_attn = jax.random.normal(k2, (dec_hid,), jnp.float32) * 0.1
    w_v = jax.random.normal(k3, (dec_hid, 1), jnp.float32) * 0.1
    params = {
        "wh": w_attn[:dec_hid, :],   # hidden portion of the concat comes first
        "we": w_attn[dec_hid:, :],   # encoder portion second
        "b": b_attn,
        "v": w_v,
    }

    hidden = jax.random.normal(k4, (n_layer, B, dec_hid), jnp.float32)
    encoder_outputs = jax.random.normal(k5, (S, B, E2), jnp.float32)
    mask = (jax.random.uniform(k6, (B, S)) > 0.3).astype(jnp.int32)
    mask = mask.at[:, 0].set(1)  # guarantee at least one valid position per row

    ref = attention_reference(hidden, encoder_outputs, mask, params)

    # f32 path (default) — bit-accurate to 1e-5 vs the reference.
    out = attention_forward(hidden, encoder_outputs, mask, params)
    out = jax.block_until_ready(out)
    assert out.shape == (B, S)
    assert jnp.allclose(out, ref, atol=1e-5, rtol=1e-5), "f32 mismatch vs reference"
    assert jnp.allclose(jnp.sum(out, axis=1), 1.0, atol=1e-5)

    # bf16 matmul path (halves the dominant HBM stream; f32 accumulation).
    out_bf16 = attention_forward(hidden, encoder_outputs, mask, params,
                                 use_bf16=True)
    out_bf16 = jax.block_until_ready(out_bf16)
    assert out_bf16.shape == (B, S)
    assert jnp.allclose(out_bf16, ref, atol=5e-2, rtol=5e-2), "bf16 mismatch vs reference"

    print("KERNEL_OK")
</pallas_src>

<mosaic_0001>
module attributes {stable_mosaic.version = 11 : i64} {
  func.func @_attention_kernel(%arg0: i32, %arg1: memref<2x32xf32, #tpu.memory_space<vmem>>, %arg2: memref<8x2x64xf32, #tpu.memory_space<vmem>>, %arg3: memref<8x2xi32, #tpu.memory_space<vmem>>, %arg4: memref<64x32xf32, #tpu.memory_space<vmem>>, %arg5: memref<1x32xf32, #tpu.memory_space<vmem>>, %arg6: memref<8x2xf32, #tpu.memory_space<vmem>>) attributes {dimension_semantics = [#tpu.dimension_semantics<parallel>], iteration_bounds = array<i64: 1>, scalar_prefetch = 0 : i64, scratch_operands = 0 : i64, tpu.core_type = #tpu.core_type<tc>, window_params = [{transform_indices = @transform_0, window_bounds = array<i64: 2, 32>}, {transform_indices = @transform_1, window_bounds = array<i64: 8, 2, 64>}, {transform_indices = @transform_2, window_bounds = array<i64: 8, 2>}, {pipeline_mode = #tpu.pipeline_mode<synchronous>, transform_indices = @transform_3, window_bounds = array<i64: 64, 32>}, {pipeline_mode = #tpu.pipeline_mode<synchronous>, transform_indices = @transform_4, window_bounds = array<i64: 1, 32>}, {transform_indices = @transform_5, window_bounds = array<i64: 8, 2>}]} {
    %c0 = arith.constant 0 : index
    %c0_0 = arith.constant 0 : index
    %c0_1 = arith.constant 0 : index
    %0 = vector.load %arg2[%c0, %c0_0, %c0_1] : memref<8x2x64xf32, #tpu.memory_space<vmem>>, vector<8x2x64xf32>
    %1 = vector.shape_cast %0 : vector<8x2x64xf32> to vector<16x64xf32>
    %c0_2 = arith.constant 0 : index
    %c0_3 = arith.constant 0 : index
    %2 = vector.load %arg4[%c0_2, %c0_3] : memref<64x32xf32, #tpu.memory_space<vmem>>, vector<64x32xf32>
    %cst = arith.constant dense<0.000000e+00> : vector<16x32xf32>
    %3 = tpu.matmul %1, %2, %cst {dimension_numbers = #tpu.dot_dimension_numbers<[1], [0], [0], [1], [0, 0, 1, 1], [], []>} : vector<16x64xf32>, vector<64x32xf32>, vector<16x32xf32> -> vector<16x32xf32>
    %4 = vector.shape_cast %3 : vector<16x32xf32> to vector<8x2x32xf32>
    %c0_4 = arith.constant 0 : index
    %c0_5 = arith.constant 0 : index
    %5 = vector.load %arg1[%c0_4, %c0_5] : memref<2x32xf32, #tpu.memory_space<vmem>>, vector<2x32xf32>
    %6 = vector.shape_cast %5 : vector<2x32xf32> to vector<1x2x32xf32>
    %7 = vector.broadcast %6 : vector<1x2x32xf32> to vector<8x2x32xf32>
    %8 = arith.addf %4, %7 : vector<8x2x32xf32>
    %9 = math.tanh %8 : vector<8x2x32xf32>
    %c0_6 = arith.constant 0 : index
    %c0_7 = arith.constant 0 : index
    %10 = vector.load %arg5[%c0_6, %c0_7] : memref<1x32xf32, #tpu.memory_space<vmem>>, vector<1x32xf32>
    %11 = vector.shape_cast %10 : vector<1x32xf32> to vector<1x1x32xf32>
    %12 = vector.broadcast %11 : vector<1x1x32xf32> to vector<8x2x32xf32>
    %13 = arith.mulf %9, %12 : vector<8x2x32xf32>
    %cst_8 = arith.constant dense<0.000000e+00> : vector<8x2xf32>
    %14 = vector.multi_reduction <add>, %13, %cst_8 [2] : vector<8x2x32xf32> to vector<8x2xf32>
    %c0_9 = arith.constant 0 : index
    %c0_10 = arith.constant 0 : index
    %15 = vector.load %arg3[%c0_9, %c0_10] : memref<8x2xi32, #tpu.memory_space<vmem>>, vector<8x2xi32>
    %c0_i32 = arith.constant 0 : i32
    %16 = vector.broadcast %c0_i32 : i32 to vector<8x2xi32>
    %17 = arith.cmpi eq, %15, %16 : vector<8x2xi32>
    %cst_11 = arith.constant -1.000000e+10 : f32
    %18 = vector.broadcast %cst_11 : f32 to vector<8x2xf32>
    %19 = arith.select %17, %18, %14 : vector<8x2xi1>, vector<8x2xf32>
    %cst_12 = arith.constant dense<0xFF800000> : vector<2xf32>
    %20 = vector.multi_reduction <maximumf>, %19, %cst_12 [0] : vector<8x2xf32> to vector<2xf32>
    %21 = vector.shape_cast %20 : vector<2xf32> to vector<1x2xf32>
    %22 = vector.broadcast %21 : vector<1x2xf32> to vector<8x2xf32>
    %23 = arith.subf %19, %22 : vector<8x2xf32>
    %24 = math.exp %23 : vector<8x2xf32>
    %cst_13 = arith.constant dense<0.000000e+00> : vector<2xf32>
    %25 = vector.multi_reduction <add>, %24, %cst_13 [0] : vector<8x2xf32> to vector<2xf32>
    %26 = vector.shape_cast %25 : vector<2xf32> to vector<1x2xf32>
    %27 = tpu.reciprocal %26 : vector<1x2xf32> -> vector<1x2xf32>
    %28 = vector.broadcast %27 : vector<1x2xf32> to vector<8x2xf32>
    %29 = arith.mulf %24, %28 : vector<8x2xf32>
    %c0_14 = arith.constant 0 : index
    %c0_15 = arith.constant 0 : index
    %30 = vector.load %arg6[%c0_14, %c0_15] : memref<8x2xf32, #tpu.memory_space<vmem>>, vector<8x2xf32>
    tpu.vector_store %arg6[%c0_14, %c0_15], %29 {strides = array<i32>} : memref<8x2xf32, #tpu.memory_space<vmem>>, vector<8x2xf32>,
    return
  }
  func.func @transform_0(%arg0: i32) -> (i32, i32) {
    %c0_i32 = arith.constant 0 : i32
    %c0_i32_0 = arith.constant 0 : i32
    return %arg0, %c0_i32 : i32, i32
  }
  func.func @transform_1(%arg0: i32) -> (i32, i32, i32) {
    %c0_i32 = arith.constant 0 : i32
    %c0_i32_0 = arith.constant 0 : i32
    %c0_i32_1 = arith.constant 0 : i32
    return %c0_i32, %arg0, %c0_i32_0 : i32, i32, i32
  }
  func.func @transform_2(%arg0: i32) -> (i32, i32) {
    %c0_i32 = arith.constant 0 : i32
    %c0_i32_0 = arith.constant 0 : i32
    return %c0_i32, %arg0 : i32, i32
  }
  func.func @transform_3(%arg0: i32) -> (i32, i32) {
    %c0_i32 = arith.constant 0 : i32
    %c0_i32_0 = arith.constant 0 : i32
    %c0_i32_1 = arith.constant 0 : i32
    return %c0_i32, %c0_i32_0 : i32, i32
  }
  func.func @transform_4(%arg0: i32) -> (i32, i32) {
    %c0_i32 = arith.constant 0 : i32
    %c0_i32_0 = arith.constant 0 : i32
    %c0_i32_1 = arith.constant 0 : i32
    return %c0_i32, %c0_i32_0 : i32, i32
  }
  func.func @transform_5(%arg0: i32) -> (i32, i32) {
    %c0_i32 = arith.constant 0 : i32
    %c0_i32_0 = arith.constant 0 : i32
    return %c0_i32, %arg0 : i32, i32
  }
}

</mosaic_0001>

<llo_original>
// kernel: tpu_custom_call.1
$region0: #{tpu_custom_call.1}
  #allocation0 [shape = 'u32[]', space=smem, size = 0x4, offset = 0x4, fixed_abs, tag = 'smem constant byte address 0x4 - core index']
  #allocation1 [shape = 'u32[72,128]{1,0:T(1,128)}', space=vmem, size = 0x9000, scoped, tag = 'internal scratch']
  %s0 = inlined_call_operand.vmem [shape: f32[2,32], index: 0, kind: input, shape index: {}]
  %s1 = inlined_call_operand.vmem [shape: f32[8,2,64], index: 1, kind: input, shape index: {}]
  %s2 = inlined_call_operand.vmem [shape: s32[8,2], index: 2, kind: input, shape index: {}]
  %s3 = inlined_call_operand.vmem [shape: f32[64,32], index: 3, kind: input, shape index: {}]
  %s4 = inlined_call_operand.vmem [shape: f32[1,32], index: 4, kind: input, shape index: {}]
  %s5 = inlined_call_operand.vmem [shape: f32[8,2], index: 5, kind: output, shape index: {}]
  %s6 = sld [smem:[#allocation0]]
  $region30: #{tpu_custom_call.1} parent=0
    _
  %s8 = ssub.s32 1, %s6
  %s9 = scalar_select 0, %s8, %s6
  // Predicated region
  $region2: #{tpu_custom_call.1} parent=0 // pred_check
    _
  $region3: #{tpu_custom_call.1} parent=0 // pred_check_branch
    %11 = sbr.rel (0) target = $region5
  $region4: #{tpu_custom_call.1} parent=0 // pred_region
    _
  $region5: #{tpu_custom_call.1} parent=0 // pred_fallthru
    _
  // Predicated region
  $region6: #{tpu_custom_call.1} parent=0 // pred_check
    _
  $region7: #{tpu_custom_call.1} parent=0 // pred_check_branch
    %13 = sbr.rel (0) target = $region9
  $region8: #{tpu_custom_call.1} parent=0 // pred_region
    _
  $region9: #{tpu_custom_call.1} parent=0 // pred_fallthru
    _
  // Predicated region
  $region10: #{tpu_custom_call.1} parent=0 // pred_check
    _
  $region11: #{tpu_custom_call.1} parent=0 // pred_check_branch
    %15 = sbr.rel (0) target = $region13
  $region12: #{tpu_custom_call.1} parent=0 // pred_region
    _
  $region13: #{tpu_custom_call.1} parent=0 // pred_fallthru
    _
  // Predicated region
  $region14: #{tpu_custom_call.1} parent=0 // pred_check
    _
  $region15: #{tpu_custom_call.1} parent=0 // pred_check_branch
    %17 = sbr.rel (0) target = $region17
  $region16: #{tpu_custom_call.1} parent=0 // pred_region
    _
  $region17: #{tpu_custom_call.1} parent=0 // pred_fallthru
    _
  // Predicated region
  $region18: #{tpu_custom_call.1} parent=0 // pred_check
    _
  $region19: #{tpu_custom_call.1} parent=0 // pred_check_branch
    %19 = sbr.rel (0) target = $region21
  $region20: #{tpu_custom_call.1} parent=0 // pred_region
    _
  $region21: #{tpu_custom_call.1} parent=0 // pred_fallthru
    _
  %v20 = vld [vmem:[%s1] sm:$0x3]
  %v21 = vld [vmem:[%s1 + $0x2] sm:$0x3]
  %v22 = vld [vmem:[%s1 + $0x4] sm:$0x3]
  %v23 = vld [vmem:[%s1 + $0x6] sm:$0x3]
  %v24 = vld [vmem:[%s1 + $0x8] sm:$0x3]
  %v25 = vld [vmem:[%s1 + $0xa] sm:$0x3]
  %v26 = vld [vmem:[%s1 + $0xc] sm:$0x3]
  %v27 = vld [vmem:[%s1 + $0xe] sm:$0x3]
  %v28 = vld [vmem:[%s3] sm:$0xff]
  %v29 = vld [vmem:[%s3 + $0x8] sm:$0xff]
  %v30 = vld [vmem:[%s3 + $0x10] sm:$0xff]
  %v31 = vld [vmem:[%s3 + $0x18] sm:$0xff]
  %v32 = vld [vmem:[%s3 + $0x20] sm:$0xff]
  %v33 = vld [vmem:[%s3 + $0x28] sm:$0xff]
  %v34 = vld [vmem:[%s3 + $0x30] sm:$0xff]
  %v35 = vld [vmem:[%s3 + $0x38] sm:$0xff]
  %44 = vst [vmem:[#allocation1] ss:$4 sm:$0xff] %v20
  %s45 = scalar_lea.vmem [#allocation1], 1
  %46 = vst [vmem:[%s45] ss:$4 sm:$0xff] %v21
  %s47 = scalar_lea.vmem [#allocation1], 2
  %48 = vst [vmem:[%s47] ss:$4 sm:$0xff] %v22
  %s49 = scalar_lea.vmem [#allocation1], 3
  %50 = vst [vmem:[%s49] ss:$4 sm:$0xff] %v23
  %s51 = scalar_lea.vmem [#allocation1], 32
  %52 = vst [vmem:[%s51] ss:$4 sm:$0xff] %v24
  %s53 = scalar_lea.vmem [#allocation1], 33
  %54 = vst [vmem:[%s53] ss:$4 sm:$0xff] %v25
  %s55 = scalar_lea.vmem [#allocation1], 34
  %56 = vst [vmem:[%s55] ss:$4 sm:$0xff] %v26
  %s57 = scalar_lea.vmem [#allocation1], 35
  %58 = vst [vmem:[%s57] ss:$4 sm:$0xff] %v27
  %v59 = vld.sshfl [vmem:[#allocation1] sm:$0xff pattern:$0x73625140]
  %v60 = vld.sshfl [vmem:[#allocation1 + $0x20] sm:$0xff pattern:$0x73625140]
  %vm61 = vcmask 523264
  %v62 = vsel %vm61, %v59, 0
  %v64 = vsel %vm61, %v60, 0
  %66 = vmatpush.msra.mxu0 0.0
  %67 = vmatpush.msra.mxu0 0.0
  %68 = vmatpush.msra.mxu0 0.0
  %69 = vmatpush.msra.mxu0 0.0
  %70 = vmatpush.msra.mxu0 0.0
  %71 = vmatpush.msra.mxu0 0.0
  %72 = vmatpush.msra.mxu0 0.0
  %73 = vmatpush.msra.mxu0 0.0
  %74 = vmatpush.msra.mxu0 %v35
  %75 = vmatpush.msra.mxu0 %v34
  %76 = vmatpush.msra.mxu0 %v33
  %77 = vmatpush.msra.mxu0 %v32
  %78 = vmatpush.msra.mxu0 %v31
  %79 = vmatpush.msra.mxu0 %v30
  %80 = vmatpush.msra.mxu0 %v29
  %81 = vmatpush.msra.mxu0 %v28
  %82 = vmatmul.f32.gmra.mxu0 %v62
  %v83 = vpop.f32.mrf.mxu0
  %v84 = vadd.f32 0.0, %v83
  %85 = vmatmul.f32.gmra.mxu0 %v64
  %v86 = vpop.f32.mrf.mxu0
  %v87 = vadd.f32 0.0, %v86
  %88 = vdwg.mxu0
  %v91 = vrot.slane %v84, 2
  %v92 = vrot.slane %v84, 4
  %v93 = vrot.slane %v84, 6
  %v94 = vrot.slane %v87, 2
  %v95 = vrot.slane %v87, 4
  %v96 = vrot.slane %v87, 6
  %v103 = vld [vmem:[%s0] sm:$0x3]
  %v104 = vadd.f32 %v84, %v103
  %v105 = vadd.f32 %v91, %v103
  %v106 = vadd.f32 %v92, %v103
  %v107 = vadd.f32 %v93, %v103
  %v108 = vadd.f32 %v87, %v103
  %v109 = vadd.f32 %v94, %v103
  %v110 = vadd.f32 %v95, %v103
  %v111 = vadd.f32 %v96, %v103
  %v112 = vtanh.pop %v104
  %v113 = vtanh.pop %v105
  %v114 = vtanh.pop %v106
  %v115 = vtanh.pop %v107
  %v116 = vtanh.pop %v108
  %v117 = vtanh.pop %v109
  %v118 = vtanh.pop %v110
  %v119 = vtanh.pop %v111
  %v120 = vld [vmem:[%s4] sm:$0x1]
  %v122 = vperm.slane %v120, 0
  %v124 = vmul.f32 %v112, %v122
  %v125 = vmul.f32 %v113, %v122
  %v126 = vmul.f32 %v114, %v122
  %v127 = vmul.f32 %v115, %v122
  %v128 = vmul.f32 %v116, %v122
  %v129 = vmul.f32 %v117, %v122
  %v130 = vmul.f32 %v118, %v122
  %v131 = vmul.f32 %v119, %v122
  %vm132 = vcmask 254976
  %v133 = vsel %vm132, %v124, 0.0
  %134 = vadd.xlane.f32.xlu0 %v133
  %v135 = vpop.xlane.xlu0 %134
  %v136 = vsel %vm132, %v125, 0.0
  %137 = vadd.xlane.f32.xlu0 %v136
  %v138 = vpop.xlane.xlu0 %137
  %v139 = vsel %vm132, %v126, 0.0
  %140 = vadd.xlane.f32.xlu0 %v139
  %v141 = vpop.xlane.xlu0 %140
  %v142 = vsel %vm132, %v127, 0.0
  %143 = vadd.xlane.f32.xlu0 %v142
  %v144 = vpop.xlane.xlu0 %143
  %v145 = vsel %vm132, %v128, 0.0
  %146 = vadd.xlane.f32.xlu0 %v145
  %v147 = vpop.xlane.xlu0 %146
  %v148 = vsel %vm132, %v129, 0.0
  %149 = vadd.xlane.f32.xlu0 %v148
  %v150 = vpop.xlane.xlu0 %149
  %v151 = vsel %vm132, %v130, 0.0
  %152 = vadd.xlane.f32.xlu0 %v151
  %v153 = vpop.xlane.xlu0 %152
  %v154 = vsel %vm132, %v131, 0.0
  %155 = vadd.xlane.f32.xlu0 %v154
  %v156 = vpop.xlane.xlu0 %155
  %v157 = vld [vmem:[%s2] sm:$0xff]
  %vm158 = vcmp.eq.s32.totalorder %v157, 0
  %v167 = vlaneseq
  %v168 = vand.u32 %v167, 127
  %v169 = vperm.slane %v135, %v168
  %v170 = vperm.slane %v138, %v168
  %v171 = vperm.slane %v141, %v168
  %v172 = vperm.slane %v144, %v168
  %v173 = vperm.slane %v147, %v168
  %v174 = vperm.slane %v150, %v168
  %v175 = vperm.slane %v153, %v168
  %v176 = vperm.slane %v156, %v168
  %vm177 = vcmask 1041409
  %v178 = vsel %vm177, %v170, %v169
  %vm179 = vcmask 1042434
  %v180 = vsel %vm179, %v171, %v178
  %vm181 = vcmask 1043459
  %v182 = vsel %vm181, %v172, %v180
  %vm183 = vcmask 1044484
  %v184 = vsel %vm183, %v173, %v182
  %vm185 = vcmask 1045509
  %v186 = vsel %vm185, %v174, %v184
  %vm187 = vcmask 1046534
  %v188 = vsel %vm187, %v175, %v186
  %vm189 = vcmask 1047559
  %v190 = vsel %vm189, %v176, %v188
  %v192 = vsel %vm158, -1e+10, %v190
  %vm193 = vcmask 15360
  %v194 = vsel %vm193, %v192, -inf
  %v195 = vrot.slane %v194, 4
  %v196 = vmax.f32 %v194, %v195
  %v197 = vrot.slane %v196, 2
  %v198 = vmax.f32 %v196, %v197
  %v199 = vrot.slane %v198, 1
  %v200 = vmax.f32 %v198, %v199
  %v201 = vsub.f32 %v192, %v200
  %v202 = vmul.f32 %v201, 1.442695
  %v203 = vpow.pop %v202
  %v204 = vsel %vm193, %v203, 0.0
  %v205 = vrot.slane %v204, 4
  %v206 = vadd.f32 %v204, %v205
  %v207 = vrot.slane %v206, 2
  %v208 = vadd.f32 %v206, %v207
  %v209 = vrot.slane %v208, 1
  %v210 = vadd.f32 %v208, %v209
  %v211 = vrcp.pop %v210
  %v212 = vmul.f32 %v210, %v211
  %v213 = vsub.f32 1.0, %v212
  %v214 = vmul.f32 %v211, %v213
  %v215 = vadd.f32 %v211, %v214
  %vm216 = vweird.f32 %v210
  %vm217 = vweird.f32 %v211
  %vm218 = vmor %vm216, %vm217
  %v219 = vsel %vm218, %v211, %v215
  %v220 = vand.u32 2147483647, %v210
  %vm221 = vcmp.eq.f32.partialorder %v220, 8.507059e+37
  %v222 = vand.u32 %v210, 2147483648
  %v223 = vor.u32 1.1754944e-38, %v222
  %v224 = vsel %vm221, %v223, %v219
  %v225 = vmul.f32 %v203, %v224
  %226 = vst.msk [vmem:[%s5] sm:$0xff] %vm193, %v225
  // Predicated region
  $region22: #{tpu_custom_call.1} parent=0 // pred_check
    _
  $region23: #{tpu_custom_call.1} parent=0 // pred_check_branch
    %228 = sbr.rel (0) target = $region25
  $region24: #{tpu_custom_call.1} parent=0 // pred_region
    _
  $region25: #{tpu_custom_call.1} parent=0 // pred_fallthru
    _
  // Predicated region
  $region26: #{tpu_custom_call.1} parent=0 // pred_check
    _
  $region27: #{tpu_custom_call.1} parent=0 // pred_check_branch
    %230 = sbr.rel (0) target = $region29
  $region28: #{tpu_custom_call.1} parent=0 // pred_region
    _
  $region29: #{tpu_custom_call.1} parent=0 // pred_fallthru
    _

</llo_original>
